<compile_context>
chip_gen: v5e
topology: v5e:2x2
jax: 0.10.0
libtpu: 0.0.40
codegen_flags: <defaults>
</compile_context>

<pallas_src>
import functools

import jax
import jax.numpy as jnp
from jax.experimental import pallas as pl
from jax.experimental.pallas import tpu as pltpu

_LANES = 128
_SUBLANES = 8
_MAX_BLOCK_ROWS = 2048  # 2048 * 128 * 4B = 1 MiB per f32 input block


def _dice_bce_partial_kernel(x_ref, t_ref, o_ref, *, rows, block_rows, need_mask):
    """Writes per-block partials: o_ref[0] = [inter, sum_x, sum_t, bce] as (8,128) tiles."""
    x = x_ref[...].astype(jnp.float32)
    t = t_ref[...].astype(jnp.float32)

    if need_mask:
        # Rows past the logical end of the array hold unspecified data; zero
        # them.  (x=0, t=0) contributes exactly 0 to all four partial sums
        # because the log terms are clamped at -100 before multiplying.
        valid = rows - pl.program_id(0) * block_rows
        row_idx = jax.lax.broadcasted_iota(jnp.int32, (block_rows, _LANES), 0)
        keep = row_idx < valid
        x = jnp.where(keep, x, 0.0)
        t = jnp.where(keep, t, 0.0)

    # Elementwise BCE (matches F.binary_cross_entropy: logs clamped at -100).
    log_x = jnp.maximum(jnp.log(x), -100.0)
    log_1mx = jnp.maximum(jnp.log(1.0 - x), -100.0)
    bce = -(t * log_x + (1.0 - t) * log_1mx)

    r = block_rows // _SUBLANES
    x3 = x.reshape(r, _SUBLANES, _LANES)
    t3 = t.reshape(r, _SUBLANES, _LANES)
    b3 = bce.reshape(r, _SUBLANES, _LANES)

    # Vreg-level partials (VPU adds only); the cross-lane/sublane reduce is
    # deferred to a single tiny JAX reduction outside the kernel.
    o_ref[0, 0] = jnp.sum(x3 * t3, axis=0)
    o_ref[0, 1] = jnp.sum(x3, axis=0)
    o_ref[0, 2] = jnp.sum(t3, axis=0)
    o_ref[0, 3] = jnp.sum(b3, axis=0)


def dice_bce_loss(inputs, targets, smooth=1.0):
    """Pallas equivalent of DiceBCELoss.forward; returns a scalar float32."""
    x = jnp.reshape(inputs, (-1,))
    t = jnp.reshape(targets, (-1,))
    n_valid = x.shape[0]

    # Pad (with exactly-neutral zeros) only if needed to land on 128 lanes.
    pad = (-n_valid) % _LANES
    if pad:
        x = jnp.pad(x, (0, pad))
        t = jnp.pad(t, (0, pad))
    rows = (n_valid + pad) // _LANES

    block_rows = min(
        _MAX_BLOCK_ROWS, ((rows + _SUBLANES - 1) // _SUBLANES) * _SUBLANES
    )
    nb = pl.cdiv(rows, block_rows)
    need_mask = (rows % block_rows) != 0

    kernel = functools.partial(
        _dice_bce_partial_kernel,
        rows=rows,
        block_rows=block_rows,
        need_mask=need_mask,
    )

    partials = pl.pallas_call(
        kernel,
        out_shape=jax.ShapeDtypeStruct((nb, 4, _SUBLANES, _LANES), jnp.float32),
        grid_spec=pltpu.PrefetchScalarGridSpec(
            num_scalar_prefetch=0,
            grid=(nb,),
            in_specs=[
                pl.BlockSpec((block_rows, _LANES), lambda i: (i, 0)),
                pl.BlockSpec((block_rows, _LANES), lambda i: (i, 0)),
            ],
            out_specs=pl.BlockSpec(
                (1, 4, _SUBLANES, _LANES), lambda i: (i, 0, 0, 0)
            ),
        ),
        compiler_params=pltpu.CompilerParams(
            dimension_semantics=("parallel",),
            vmem_limit_bytes=32 * 1024 * 1024,
        ),
    )(x.reshape(rows, _LANES), t.reshape(rows, _LANES))

    # Tiny finalization in plain JAX (combines per-core/per-block partials).
    sums = jnp.sum(partials, axis=(0, 2, 3))  # (4,) = [inter, sum_x, sum_t, bce]
    inter, sum_x, sum_t, bce_total = sums[0], sums[1], sums[2], sums[3]
    dice_loss = 1.0 - (2.0 * inter + smooth) / (sum_x + sum_t + smooth)
    bce_mean = bce_total / n_valid
    return (bce_mean + dice_loss).astype(jnp.float32)


def _reference(inputs, targets, smooth=1.0):
    x = jnp.reshape(inputs, (-1,)).astype(jnp.float32)
    t = jnp.reshape(targets, (-1,)).astype(jnp.float32)
    inter = jnp.sum(x * t)
    dice = 1.0 - (2.0 * inter + smooth) / (jnp.sum(x) + jnp.sum(t) + smooth)
    bce = jnp.mean(
        -(t * jnp.maximum(jnp.log(x), -100.0)
          + (1.0 - t) * jnp.maximum(jnp.log(1.0 - x), -100.0))
    )
    return bce + dice


if __name__ == "__main__":
    key = jax.random.PRNGKey(0)
    k1, k2 = jax.random.split(key)
    # Segmentation-style tensors: inputs are probabilities in (0,1),
    # targets are binary masks. Shape NCHW = (2, 4, 16, 16).
    inputs = jax.nn.sigmoid(jax.random.normal(k1, (2, 4, 16, 16), jnp.float32))
    targets = (jax.random.uniform(k2, (2, 4, 16, 16)) > 0.5).astype(jnp.float32)

    loss_fn = jax.jit(dice_bce_loss)
    loss = jax.block_until_ready(loss_fn(inputs, targets))
    ref = jax.block_until_ready(_reference(inputs, targets))

    assert jnp.allclose(loss, ref, rtol=1e-5, atol=1e-5), (loss, ref)
    print("KERNEL_OK")
</pallas_src>

<mosaic_0001>
module attributes {stable_mosaic.version = 11 : i64} {
  func.func @_dice_bce_partial_kernel(%arg0: i32, %arg1: memref<16x128xf32, #tpu.memory_space<vmem>>, %arg2: memref<16x128xf32, #tpu.memory_space<vmem>>, %arg3: memref<1x4x8x128xf32, #tpu.memory_space<vmem>>) attributes {dimension_semantics = [#tpu.dimension_semantics<parallel>], iteration_bounds = array<i64: 1>, scalar_prefetch = 0 : i64, scratch_operands = 0 : i64, tpu.core_type = #tpu.core_type<tc>, window_params = [{transform_indices = @transform_0, window_bounds = array<i64: 16, 128>}, {transform_indices = @transform_1, window_bounds = array<i64: 16, 128>}, {transform_indices = @transform_2, window_bounds = array<i64: 1, 4, 8, 128>}]} {
    %c0 = arith.constant 0 : index
    %c0_0 = arith.constant 0 : index
    %0 = vector.load %arg1[%c0, %c0_0] : memref<16x128xf32, #tpu.memory_space<vmem>>, vector<16x128xf32>
    %c0_1 = arith.constant 0 : index
    %c0_2 = arith.constant 0 : index
    %1 = vector.load %arg2[%c0_1, %c0_2] : memref<16x128xf32, #tpu.memory_space<vmem>>, vector<16x128xf32>
    %2 = math.log %0 : vector<16x128xf32>
    %cst = arith.constant -1.000000e+02 : f32
    %3 = vector.broadcast %cst : f32 to vector<16x128xf32>
    %4 = arith.maximumf %2, %3 : vector<16x128xf32>
    %cst_3 = arith.constant 1.000000e+00 : f32
    %5 = vector.broadcast %cst_3 : f32 to vector<16x128xf32>
    %6 = arith.subf %5, %0 : vector<16x128xf32>
    %7 = math.log %6 : vector<16x128xf32>
    %cst_4 = arith.constant -1.000000e+02 : f32
    %8 = vector.broadcast %cst_4 : f32 to vector<16x128xf32>
    %9 = arith.maximumf %7, %8 : vector<16x128xf32>
    %10 = arith.mulf %1, %4 : vector<16x128xf32>
    %cst_5 = arith.constant 1.000000e+00 : f32
    %11 = vector.broadcast %cst_5 : f32 to vector<16x128xf32>
    %12 = arith.subf %11, %1 : vector<16x128xf32>
    %13 = arith.mulf %12, %9 : vector<16x128xf32>
    %14 = arith.addf %10, %13 : vector<16x128xf32>
    %cst_6 = arith.constant 0.000000e+00 : f32
    %15 = vector.broadcast %cst_6 : f32 to vector<16x128xf32>
    %16 = arith.subf %15, %14 : vector<16x128xf32>
    %17 = vector.shape_cast %0 : vector<16x128xf32> to vector<2x8x128xf32>
    %18 = vector.shape_cast %1 : vector<16x128xf32> to vector<2x8x128xf32>
    %19 = vector.shape_cast %16 : vector<16x128xf32> to vector<2x8x128xf32>
    %20 = arith.mulf %17, %18 : vector<2x8x128xf32>
    %cst_7 = arith.constant dense<0.000000e+00> : vector<8x128xf32>
    %21 = vector.multi_reduction <add>, %20, %cst_7 [0] : vector<2x8x128xf32> to vector<8x128xf32>
    %c0_8 = arith.constant 0 : index
    %c0_9 = arith.constant 0 : index
    %c0_10 = arith.constant 0 : index
    %c0_11 = arith.constant 0 : index
    %22 = vector.load %arg3[%c0_8, %c0_9, %c0_10, %c0_11] : memref<1x4x8x128xf32, #tpu.memory_space<vmem>>, vector<1x1x8x128xf32>
    %23 = vector.shape_cast %22 : vector<1x1x8x128xf32> to vector<8x128xf32>
    %24 = vector.shape_cast %21 : vector<8x128xf32> to vector<1x1x8x128xf32>
    tpu.vector_store %arg3[%c0_8, %c0_9, %c0_10, %c0_11], %24 {strides = array<i32>} : memref<1x4x8x128xf32, #tpu.memory_space<vmem>>, vector<1x1x8x128xf32>,
    %cst_12 = arith.constant dense<0.000000e+00> : vector<8x128xf32>
    %25 = vector.multi_reduction <add>, %17, %cst_12 [0] : vector<2x8x128xf32> to vector<8x128xf32>
    %c0_13 = arith.constant 0 : index
    %c1 = arith.constant 1 : index
    %c0_14 = arith.constant 0 : index
    %c0_15 = arith.constant 0 : index
    %26 = vector.load %arg3[%c0_13, %c1, %c0_14, %c0_15] : memref<1x4x8x128xf32, #tpu.memory_space<vmem>>, vector<1x1x8x128xf32>
    %27 = vector.shape_cast %26 : vector<1x1x8x128xf32> to vector<8x128xf32>
    %28 = vector.shape_cast %25 : vector<8x128xf32> to vector<1x1x8x128xf32>
    tpu.vector_store %arg3[%c0_13, %c1, %c0_14, %c0_15], %28 {strides = array<i32>} : memref<1x4x8x128xf32, #tpu.memory_space<vmem>>, vector<1x1x8x128xf32>,
    %cst_16 = arith.constant dense<0.000000e+00> : vector<8x128xf32>
    %29 = vector.multi_reduction <add>, %18, %cst_16 [0] : vector<2x8x128xf32> to vector<8x128xf32>
    %c0_17 = arith.constant 0 : index
    %c2 = arith.constant 2 : index
    %c0_18 = arith.constant 0 : index
    %c0_19 = arith.constant 0 : index
    %30 = vector.load %arg3[%c0_17, %c2, %c0_18, %c0_19] : memref<1x4x8x128xf32, #tpu.memory_space<vmem>>, vector<1x1x8x128xf32>
    %31 = vector.shape_cast %30 : vector<1x1x8x128xf32> to vector<8x128xf32>
    %32 = vector.shape_cast %29 : vector<8x128xf32> to vector<1x1x8x128xf32>
    tpu.vector_store %arg3[%c0_17, %c2, %c0_18, %c0_19], %32 {strides = array<i32>} : memref<1x4x8x128xf32, #tpu.memory_space<vmem>>, vector<1x1x8x128xf32>,
    %cst_20 = arith.constant dense<0.000000e+00> : vector<8x128xf32>
    %33 = vector.multi_reduction <add>, %19, %cst_20 [0] : vector<2x8x128xf32> to vector<8x128xf32>
    %c0_21 = arith.constant 0 : index
    %c3 = arith.constant 3 : index
    %c0_22 = arith.constant 0 : index
    %c0_23 = arith.constant 0 : index
    %34 = vector.load %arg3[%c0_21, %c3, %c0_22, %c0_23] : memref<1x4x8x128xf32, #tpu.memory_space<vmem>>, vector<1x1x8x128xf32>
    %35 = vector.shape_cast %34 : vector<1x1x8x128xf32> to vector<8x128xf32>
    %36 = vector.shape_cast %33 : vector<8x128xf32> to vector<1x1x8x128xf32>
    tpu.vector_store %arg3[%c0_21, %c3, %c0_22, %c0_23], %36 {strides = array<i32>} : memref<1x4x8x128xf32, #tpu.memory_space<vmem>>, vector<1x1x8x128xf32>,
    return
  }
  func.func @transform_0(%arg0: i32) -> (i32, i32) {
    %c0_i32 = arith.constant 0 : i32
    %c0_i32_0 = arith.constant 0 : i32
    return %arg0, %c0_i32 : i32, i32
  }
  func.func @transform_1(%arg0: i32) -> (i32, i32) {
    %c0_i32 = arith.constant 0 : i32
    %c0_i32_0 = arith.constant 0 : i32
    return %arg0, %c0_i32 : i32, i32
  }
  func.func @transform_2(%arg0: i32) -> (i32, i32, i32, i32) {
    %c0_i32 = arith.constant 0 : i32
    %c0_i32_0 = arith.constant 0 : i32
    %c0_i32_1 = arith.constant 0 : i32
    %c0_i32_2 = arith.constant 0 : i32
    return %arg0, %c0_i32, %c0_i32_0, %c0_i32_1 : i32, i32, i32, i32
  }
}

</mosaic_0001>

<llo_original>
// kernel: dice_bce_loss.1
$region0: #{dice_bce_loss.1}
  #allocation0 [shape = 'u32[]', space=smem, size = 0x4, offset = 0x4, fixed_abs, tag = 'smem constant byte address 0x4 - core index']
  #allocation1 [shape = 'u32[72,128]{1,0:T(1,128)}', space=vmem, size = 0x9000, scoped, tag = 'internal scratch']
  %s0 = inlined_call_operand.vmem [shape: f32[16,128], index: 0, kind: input, shape index: {}]
  %s1 = inlined_call_operand.vmem [shape: f32[16,128], index: 1, kind: input, shape index: {}]
  %s2 = inlined_call_operand.vmem [shape: f32[1,4,8,128], index: 2, kind: output, shape index: {}]
  %s3 = sld [smem:[#allocation0]]
  $region18: #{dice_bce_loss.1} parent=0
    _
  %s5 = ssub.s32 1, %s3
  %s6 = scalar_select 0, %s5, %s3
  // Predicated region
  $region2: #{dice_bce_loss.1} parent=0 // pred_check
    _
  $region3: #{dice_bce_loss.1} parent=0 // pred_check_branch
    %8 = sbr.rel (0) target = $region5
  $region4: #{dice_bce_loss.1} parent=0 // pred_region
    _
  $region5: #{dice_bce_loss.1} parent=0 // pred_fallthru
    _
  // Predicated region
  $region6: #{dice_bce_loss.1} parent=0 // pred_check
    _
  $region7: #{dice_bce_loss.1} parent=0 // pred_check_branch
    %10 = sbr.rel (0) target = $region9
  $region8: #{dice_bce_loss.1} parent=0 // pred_region
    _
  $region9: #{dice_bce_loss.1} parent=0 // pred_fallthru
    _
  %v11 = vld [vmem:[%s0] sm:$0xff]
  %v12 = vld [vmem:[%s0 + $0x8] sm:$0xff]
  %v13 = vld [vmem:[%s1] sm:$0xff]
  %v14 = vld [vmem:[%s1 + $0x8] sm:$0xff]
  %v15 = vlog2.pop %v11
  %v16 = vmul.f32 %v15, 0.6931472
  %v17 = vlog2.pop %v12
  %v18 = vmul.f32 %v17, 0.6931472
  %v19 = vmax.f32 %v16, -100.0
  %v20 = vmax.f32 %v18, -100.0
  %v21 = vsub.f32 1.0, %v11
  %v22 = vsub.f32 1.0, %v12
  %v23 = vlog2.pop %v21
  %v24 = vmul.f32 %v23, 0.6931472
  %v25 = vlog2.pop %v22
  %v26 = vmul.f32 %v25, 0.6931472
  %v27 = vmax.f32 %v24, -100.0
  %v28 = vmax.f32 %v26, -100.0
  %v29 = vmul.f32 %v13, %v19
  %v30 = vmul.f32 %v14, %v20
  %v31 = vsub.f32 1.0, %v13
  %v32 = vsub.f32 1.0, %v14
  %v33 = vmul.f32 %v31, %v27
  %v34 = vmul.f32 %v32, %v28
  %v35 = vadd.f32 %v29, %v33
  %v36 = vadd.f32 %v30, %v34
  %v37 = vsub.f32 0.0, %v35
  %v38 = vsub.f32 0.0, %v36
  %v39 = vmul.f32 %v11, %v13
  %v40 = vmul.f32 %v12, %v14
  %v41 = vadd.f32 %v39, %v40
  %42 = vst [vmem:[%s2] sm:$0xff] %v41
  %v43 = vadd.f32 %v11, %v12
  %s44 = scalar_lea.vmem %s2, 8
  %45 = vst [vmem:[%s44] sm:$0xff] %v43
  %v46 = vadd.f32 %v13, %v14
  %s47 = scalar_lea.vmem %s2, 16
  %48 = vst [vmem:[%s47] sm:$0xff] %v46
  %v49 = vadd.f32 %v37, %v38
  %s50 = scalar_lea.vmem %s2, 24
  %51 = vst [vmem:[%s50] sm:$0xff] %v49
  // Predicated region
  $region10: #{dice_bce_loss.1} parent=0 // pred_check
    _
  $region11: #{dice_bce_loss.1} parent=0 // pred_check_branch
    %53 = sbr.rel (0) target = $region13
  $region12: #{dice_bce_loss.1} parent=0 // pred_region
    _
  $region13: #{dice_bce_loss.1} parent=0 // pred_fallthru
    _
  // Predicated region
  $region14: #{dice_bce_loss.1} parent=0 // pred_check
    _
  $region15: #{dice_bce_loss.1} parent=0 // pred_check_branch
    %55 = sbr.rel (0) target = $region17
  $region16: #{dice_bce_loss.1} parent=0 // pred_region
    _
  $region17: #{dice_bce_loss.1} parent=0 // pred_fallthru
    _

</llo_original>
